<compile_context>
chip_gen: v6e
topology: v6e:2x2x1
jax: 0.10.0
libtpu: 0.0.40
codegen_flags: <defaults>
</compile_context>

<pallas_src>
import math

import jax
import jax.numpy as jnp
from jax.experimental import pallas as pl
from jax.experimental.pallas import tpu as pltpu

# config (small, consistent with the module's __init__)
D_HIDN = 32      # config.d_hidn
N_HEAD = 4       # config.n_head
D_HEAD = 8       # config.d_head
D_FF = 64        # config.d_ff
EPS = 1e-12      # config.layer_norm_epsilon
SEQ = 8
BATCH = 2
SCALE = 1.0 / math.sqrt(D_HEAD)
HD = N_HEAD * D_HEAD   # 32


def _layer_norm(x, g, b, eps):
    mu = jnp.mean(x, axis=-1, keepdims=True)
    var = jnp.mean((x - mu) ** 2, axis=-1, keepdims=True)
    return (x - mu) * jax.lax.rsqrt(var + eps) * g + b


def encoder_layer_kernel(x_ref, bias_ref, hsel_ref, ssum_ref,
                         wqkv_ref, bqkv_ref, wo_ref, bo_ref,
                         ln1g_ref, ln1b_ref,
                         w1_ref, b1_ref, w2_ref, b2_ref,
                         ln2g_ref, ln2b_ref,
                         out_ref, attn_ref):
    B, S, D = x_ref.shape
    HS = N_HEAD * S

    xf = x_ref[...].reshape(B * S, D)       # S == 8 == sublane tile: free reshape

    # --- fused Q/K/V projection (score scale already folded into Q columns) --
    qkv = jnp.dot(xf, wqkv_ref[...],
                  preferred_element_type=jnp.float32) + bqkv_ref[...]   # (B*S, 3*HD)
    q3 = qkv[:, 0 * HD:1 * HD].reshape(B, S, HD)
    k3 = qkv[:, 1 * HD:2 * HD].reshape(B, S, HD)
    v3 = qkv[:, 2 * HD:3 * HD].reshape(B, S, HD)

    # --- head-batched attention -------------------------------------------
    # Replicate K/V rows once per head and zero the cross-head lane stripes
    # with the constant block-diagonal selector: a single leading-batch
    # contraction then yields all heads' scores / contexts (no per-head loop,
    # no 8-lane slicing, no per-head stack/concat of results).
    hsel = hsel_ref[...]                                        # (1, HS, HD)
    kexp = jnp.concatenate([k3] * N_HEAD, axis=1) * hsel        # (B, HS, HD)
    vexp = jnp.concatenate([v3] * N_HEAD, axis=1) * hsel        # (B, HS, HD)

    # scores for all heads in one contraction, lane-dense (B*S, H*S) layout
    s = jnp.einsum('bqc,bmc->bqm', q3, kexp,
                   preferred_element_type=jnp.float32)          # (B, S, HS)
    s = s.reshape(B * S, HS) + bias_ref[...]                    # additive -1e9 mask

    # one softmax pass over all heads; the row-wise global max is equivalent
    # to the per-head max for the resulting probabilities.
    s = s - jnp.max(s, axis=-1, keepdims=True)
    e = jnp.exp(s)
    # per-head denominator (broadcast back to every lane of its head) via a
    # block-diagonal ones matmul: runs on the otherwise idle MXU.
    denom = jnp.dot(e, ssum_ref[...], preferred_element_type=jnp.float32)
    p = e / denom       # exact divide: attn_prob is a user-visible output

    attn_ref[...] = p   # single lane-dense (B*S, H*S) store

    # head-batched context; lanes come out already in PyTorch's (head, d_head)
    # concat order, so no concatenate is needed before the output projection.
    ctx = jnp.einsum('bqm,bmc->bqc', p.reshape(B, S, HS), vexp,
                     preferred_element_type=jnp.float32)        # (B, S, HD)
    context = ctx.reshape(B * S, HD)

    att_out = jnp.dot(context, wo_ref[...],
                      preferred_element_type=jnp.float32) + bo_ref[...]
    # dropout: identity (eval mode)

    # --- residual + LayerNorm1 ---------------------------------------------
    h1 = _layer_norm(xf + att_out, ln1g_ref[...], ln1b_ref[...], EPS)

    # --- position-wise FFN (Conv1d(k=1) == per-position linear) -------------
    f = jnp.dot(h1, w1_ref[...], preferred_element_type=jnp.float32) + b1_ref[...]
    # TODO(synk): PyTorch F.gelu defaults to the exact erf form; tanh
    # approximation used for guaranteed Mosaic lowering (max abs diff ~1e-3).
    f = jax.nn.gelu(f, approximate=True)
    f = jnp.dot(f, w2_ref[...], preferred_element_type=jnp.float32) + b2_ref[...]

    # --- residual + LayerNorm2, stored as one lane-dense (B*S, D) slab -------
    out_ref[...] = _layer_norm(f + h1, ln2g_ref[...], ln2b_ref[...], EPS)


def encoder_layer(x, attn_mask, params):
    (wq, bq, wk, bk, wv, bv, wo, bo, ln1g, ln1b,
     w1, b1, w2, b2, ln2g, ln2b) = params
    B, S, D = x.shape
    HS = N_HEAD * S

    # Fold the 1/sqrt(d_head) score scale into the Q projection (it rides
    # along the existing matmul), then fuse Q/K/V into one (D, 3*HD) weight:
    # 96 output lanes fit a single MXU tile width.
    wqkv = jnp.concatenate([wq * SCALE, wk, wv], axis=1)        # (D, 3*HD)
    bqkv = jnp.concatenate([bq * SCALE, bk, bv], axis=1)        # (1, 3*HD)

    # Additive attention-mask bias, pre-tiled across heads into the kernel's
    # lane-dense (B*S, H*S) score layout (1.0 == masked).
    bias = (jnp.tile(attn_mask, (1, 1, N_HEAD)) * jnp.float32(-1e9)).reshape(B * S, HS)

    # Constant head-block-diagonal selectors (built once, outside the kernel):
    #   head_sel[(h,k), (h',d)] = 1 iff h == h'  -> batches all heads into one
    #       score / one context contraction.
    #   seg_sum [(h,k'), (h,k)] = 1 iff same h   -> per-head softmax
    #       denominator as a single matmul.
    row_head = jnp.arange(HS) // S
    col_head = jnp.arange(HD) // D_HEAD
    head_sel = (row_head[:, None] == col_head[None, :]).astype(jnp.float32)[None]  # (1, HS, HD)
    seg_sum = (row_head[:, None] == row_head[None, :]).astype(jnp.float32)         # (HS, HS)

    fused = [wqkv, bqkv, wo, bo, ln1g, ln1b, w1, b1, w2, b2, ln2g, ln2b]
    inputs = [x, bias, head_sel, seg_sum] + fused

    # Explicit VMEM placement for every operand/output; grid=() on purpose
    # (whole workload fits VMEM; per-grid-step overhead would dominate here).
    vmem = pl.BlockSpec(memory_space=pltpu.MemorySpace.VMEM)
    out_flat, attn_flat = pl.pallas_call(
        encoder_layer_kernel,
        out_shape=[
            jax.ShapeDtypeStruct((B * S, D), jnp.float32),
            jax.ShapeDtypeStruct((B * S, HS), jnp.float32),
        ],
        in_specs=[vmem] * len(inputs),
        out_specs=[vmem, vmem],
    )(*inputs)

    ffn_out = out_flat.reshape(B, S, D)
    # lane-dense kernel layout -> PyTorch's (B, H, S, S), reshaped in the wrapper
    attn_prob = attn_flat.reshape(B, S, N_HEAD, S).transpose(0, 2, 1, 3)
    return ffn_out, attn_prob


def encoder_layer_reference(x, attn_mask, params):
    """Pure-JAX reference mirroring the PyTorch forward (eval mode)."""
    (wq, bq, wk, bk, wv, bv, wo, bo, ln1g, ln1b,
     w1, b1, w2, b2, ln2g, ln2b) = params
    B, S, D = x.shape
    hi = jax.lax.Precision.HIGHEST

    def heads(t):   # (B, S, H*Dh) -> (B, H, S, Dh)
        return t.reshape(B, S, N_HEAD, D_HEAD).transpose(0, 2, 1, 3)

    q = heads(jnp.dot(x, wq, precision=hi) + bq)
    k = heads(jnp.dot(x, wk, precision=hi) + bk)
    v = heads(jnp.dot(x, wv, precision=hi) + bv)

    scores = jnp.einsum('bhqd,bhkd->bhqk', q, k, precision=hi) * SCALE
    scores = jnp.where(attn_mask[:, None, :, :] > 0.5, jnp.float32(-1e9), scores)
    probs = jax.nn.softmax(scores, axis=-1)
    ctx = jnp.einsum('bhqk,bhkd->bhqd', probs, v, precision=hi)
    ctx = ctx.transpose(0, 2, 1, 3).reshape(B, S, HD)

    att = jnp.dot(ctx, wo, precision=hi) + bo
    h1 = _layer_norm(x + att, ln1g, ln1b, EPS)
    f = jax.nn.gelu(jnp.dot(h1, w1, precision=hi) + b1, approximate=True)
    f = jnp.dot(f, w2, precision=hi) + b2
    out = _layer_norm(f + h1, ln2g, ln2b, EPS)
    return out, probs


def init_params(key):
    ks = jax.random.split(key, 12)

    def w(k, fan_in, fan_out):
        return jax.random.normal(k, (fan_in, fan_out), jnp.float32) * 0.02

    def b(k, n):
        return jax.random.normal(k, (1, n), jnp.float32) * 0.01

    wq, bq = w(ks[0], D_HIDN, HD), b(ks[1], HD)
    wk, bk = w(ks[2], D_HIDN, HD), b(ks[3], HD)
    wv, bv = w(ks[4], D_HIDN, HD), b(ks[5], HD)
    wo, bo = w(ks[6], HD, D_HIDN), b(ks[7], D_HIDN)
    ln1g = jnp.ones((1, D_HIDN), jnp.float32)
    ln1b = jnp.zeros((1, D_HIDN), jnp.float32)
    # Conv1d(d_hidn -> d_ff, k=1) weight (d_ff, d_hidn, 1) folded to (d_hidn, d_ff)
    w1, b1 = w(ks[8], D_HIDN, D_FF), b(ks[9], D_FF)
    # Conv1d(d_ff -> d_hidn, k=1) weight folded to (d_ff, d_hidn)
    w2, b2 = w(ks[10], D_FF, D_HIDN), b(ks[11], D_HIDN)
    ln2g = jnp.ones((1, D_HIDN), jnp.float32)
    ln2b = jnp.zeros((1, D_HIDN), jnp.float32)

    return [wq, bq, wk, bk, wv, bv, wo, bo, ln1g, ln1b,
            w1, b1, w2, b2, ln2g, ln2b]


if __name__ == "__main__":
    key = jax.random.PRNGKey(0)
    kx, kp = jax.random.split(key)

    x = jax.random.normal(kx, (BATCH, SEQ, D_HIDN), jnp.float32)

    # pad-style attention mask: 1.0 where the key position is padding
    lens = jnp.array([SEQ, 5], dtype=jnp.int32)
    j = jnp.arange(SEQ)
    attn_mask = jnp.broadcast_to(
        (j[None, None, :] >= lens[:, None, None]).astype(jnp.float32),
        (BATCH, SEQ, SEQ))

    params = init_params(kp)

    ffn_out, attn_prob = encoder_layer(x, attn_mask, params)
    jax.block_until_ready((ffn_out, attn_prob))

    assert ffn_out.shape == (BATCH, SEQ, D_HIDN)
    assert attn_prob.shape == (BATCH, N_HEAD, SEQ, SEQ)

    # parity check against the pure-JAX reference (same tanh-gelu approximation)
    ref_out, ref_prob = encoder_layer_reference(x, attn_mask, params)
    assert jnp.allclose(ffn_out, ref_out, atol=2e-3, rtol=2e-3), \
        float(jnp.max(jnp.abs(ffn_out - ref_out)))
    assert jnp.allclose(attn_prob, ref_prob, atol=2e-3, rtol=0.0), \
        float(jnp.max(jnp.abs(attn_prob - ref_prob)))

    print("KERNEL_OK")
</pallas_src>

<mosaic_0001>
module attributes {stable_mosaic.version = 11 : i64} {
  func.func @encoder_layer_kernel(%arg0: memref<2x8x32xf32, #tpu.memory_space<vmem>>, %arg1: memref<16x32xf32, #tpu.memory_space<vmem>>, %arg2: memref<1x32x32xf32, #tpu.memory_space<vmem>>, %arg3: memref<32x32xf32, #tpu.memory_space<vmem>>, %arg4: memref<32x96xf32, #tpu.memory_space<vmem>>, %arg5: memref<1x96xf32, #tpu.memory_space<vmem>>, %arg6: memref<32x32xf32, #tpu.memory_space<vmem>>, %arg7: memref<1x32xf32, #tpu.memory_space<vmem>>, %arg8: memref<1x32xf32, #tpu.memory_space<vmem>>, %arg9: memref<1x32xf32, #tpu.memory_space<vmem>>, %arg10: memref<32x64xf32, #tpu.memory_space<vmem>>, %arg11: memref<1x64xf32, #tpu.memory_space<vmem>>, %arg12: memref<64x32xf32, #tpu.memory_space<vmem>>, %arg13: memref<1x32xf32, #tpu.memory_space<vmem>>, %arg14: memref<1x32xf32, #tpu.memory_space<vmem>>, %arg15: memref<1x32xf32, #tpu.memory_space<vmem>>, %arg16: memref<16x32xf32, #tpu.memory_space<vmem>>, %arg17: memref<16x32xf32, #tpu.memory_space<vmem>>) attributes {dimension_semantics = [], scalar_prefetch = 0 : i64, scratch_operands = 0 : i64, tpu.core_type = #tpu.core_type<tc>} {
    %c0 = arith.constant 0 : index
    %c0_0 = arith.constant 0 : index
    %c0_1 = arith.constant 0 : index
    %0 = vector.load %arg0[%c0, %c0_0, %c0_1] : memref<2x8x32xf32, #tpu.memory_space<vmem>>, vector<2x8x32xf32>
    %1 = vector.shape_cast %0 : vector<2x8x32xf32> to vector<16x32xf32>
    %c0_2 = arith.constant 0 : index
    %c0_3 = arith.constant 0 : index
    %2 = vector.load %arg4[%c0_2, %c0_3] : memref<32x96xf32, #tpu.memory_space<vmem>>, vector<32x96xf32>
    %cst = arith.constant dense<0.000000e+00> : vector<16x96xf32>
    %3 = tpu.matmul %1, %2, %cst {dimension_numbers = #tpu.dot_dimension_numbers<[1], [0], [0], [1], [0, 0, 1, 1], [], []>} : vector<16x32xf32>, vector<32x96xf32>, vector<16x96xf32> -> vector<16x96xf32>
    %c0_4 = arith.constant 0 : index
    %c0_5 = arith.constant 0 : index
    %4 = vector.load %arg5[%c0_4, %c0_5] : memref<1x96xf32, #tpu.memory_space<vmem>>, vector<1x96xf32>
    %5 = vector.broadcast %4 : vector<1x96xf32> to vector<16x96xf32>
    %6 = arith.addf %3, %5 : vector<16x96xf32>
    %7 = vector.extract_strided_slice %6 {offsets = [0, 0], sizes = [16, 32], strides = [1, 1]} : vector<16x96xf32> to vector<16x32xf32>
    %8 = vector.shape_cast %7 : vector<16x32xf32> to vector<2x8x32xf32>
    %9 = vector.extract_strided_slice %6 {offsets = [0, 32], sizes = [16, 32], strides = [1, 1]} : vector<16x96xf32> to vector<16x32xf32>
    %10 = vector.shape_cast %9 : vector<16x32xf32> to vector<2x8x32xf32>
    %11 = vector.extract_strided_slice %6 {offsets = [0, 64], sizes = [16, 32], strides = [1, 1]} : vector<16x96xf32> to vector<16x32xf32>
    %12 = vector.shape_cast %11 : vector<16x32xf32> to vector<2x8x32xf32>
    %c0_6 = arith.constant 0 : index
    %c0_7 = arith.constant 0 : index
    %c0_8 = arith.constant 0 : index
    %13 = vector.load %arg2[%c0_6, %c0_7, %c0_8] : memref<1x32x32xf32, #tpu.memory_space<vmem>>, vector<1x32x32xf32>
    %14 = tpu.concatenate %10, %10, %10, %10 in 1 : vector<2x8x32xf32>, vector<2x8x32xf32>, vector<2x8x32xf32>, vector<2x8x32xf32> -> vector<2x32x32xf32>
    %15 = vector.broadcast %13 : vector<1x32x32xf32> to vector<2x32x32xf32>
    %16 = arith.mulf %14, %15 : vector<2x32x32xf32>
    %17 = tpu.concatenate %12, %12, %12, %12 in 1 : vector<2x8x32xf32>, vector<2x8x32xf32>, vector<2x8x32xf32>, vector<2x8x32xf32> -> vector<2x32x32xf32>
    %18 = vector.broadcast %13 : vector<1x32x32xf32> to vector<2x32x32xf32>
    %19 = arith.mulf %17, %18 : vector<2x32x32xf32>
    "tpu.trace_start"() <{level = 10 : i32, message = "bqc,bmc->bqm"}> : () -> ()
    %cst_9 = arith.constant dense<0.000000e+00> : vector<2x8x32xf32>
    %20 = tpu.matmul %8, %16, %cst_9 {dimension_numbers = #tpu.dot_dimension_numbers<[2], [2], [1], [1], [0, 0, 0, 1, 1, 1], [0], [0]>} : vector<2x8x32xf32>, vector<2x32x32xf32>, vector<2x8x32xf32> -> vector<2x8x32xf32>
    "tpu.trace_stop"() : () -> ()
    %21 = vector.shape_cast %20 : vector<2x8x32xf32> to vector<16x32xf32>
    %c0_10 = arith.constant 0 : index
    %c0_11 = arith.constant 0 : index
    %22 = vector.load %arg1[%c0_10, %c0_11] : memref<16x32xf32, #tpu.memory_space<vmem>>, vector<16x32xf32>
    %23 = arith.addf %21, %22 : vector<16x32xf32>
    %cst_12 = arith.constant dense<0xFF800000> : vector<16xf32>
    %24 = vector.multi_reduction <maximumf>, %23, %cst_12 [1] : vector<16x32xf32> to vector<16xf32>
    %25 = vector.shape_cast %24 : vector<16xf32> to vector<16x1xf32>
    %26 = vector.broadcast %25 : vector<16x1xf32> to vector<16x32xf32>
    %27 = arith.subf %23, %26 : vector<16x32xf32>
    %28 = math.exp %27 : vector<16x32xf32>
    %c0_13 = arith.constant 0 : index
    %c0_14 = arith.constant 0 : index
    %29 = vector.load %arg3[%c0_13, %c0_14] : memref<32x32xf32, #tpu.memory_space<vmem>>, vector<32x32xf32>
    %cst_15 = arith.constant dense<0.000000e+00> : vector<16x32xf32>
    %30 = tpu.matmul %28, %29, %cst_15 {dimension_numbers = #tpu.dot_dimension_numbers<[1], [0], [0], [1], [0, 0, 1, 1], [], []>} : vector<16x32xf32>, vector<32x32xf32>, vector<16x32xf32> -> vector<16x32xf32>
    %31 = arith.divf %28, %30 : vector<16x32xf32>
    %c0_16 = arith.constant 0 : index
    %c0_17 = arith.constant 0 : index
    %32 = vector.load %arg17[%c0_16, %c0_17] : memref<16x32xf32, #tpu.memory_space<vmem>>, vector<16x32xf32>
    tpu.vector_store %arg17[%c0_16, %c0_17], %31 {strides = array<i32>} : memref<16x32xf32, #tpu.memory_space<vmem>>, vector<16x32xf32>,
    %33 = vector.shape_cast %31 : vector<16x32xf32> to vector<2x8x32xf32>
    "tpu.trace_start"() <{level = 10 : i32, message = "bqm,bmc->bqc"}> : () -> ()
    %cst_18 = arith.constant dense<0.000000e+00> : vector<2x8x32xf32>
    %34 = tpu.matmul %33, %19, %cst_18 {dimension_numbers = #tpu.dot_dimension_numbers<[2], [1], [1], [2], [0, 0, 0, 1, 1, 2], [0], [0]>} : vector<2x8x32xf32>, vector<2x32x32xf32>, vector<2x8x32xf32> -> vector<2x8x32xf32>
    "tpu.trace_stop"() : () -> ()
    %35 = vector.shape_cast %34 : vector<2x8x32xf32> to vector<16x32xf32>
    %c0_19 = arith.constant 0 : index
    %c0_20 = arith.constant 0 : index
    %36 = vector.load %arg6[%c0_19, %c0_20] : memref<32x32xf32, #tpu.memory_space<vmem>>, vector<32x32xf32>
    %cst_21 = arith.constant dense<0.000000e+00> : vector<16x32xf32>
    %37 = tpu.matmul %35, %36, %cst_21 {dimension_numbers = #tpu.dot_dimension_numbers<[1], [0], [0], [1], [0, 0, 1, 1], [], []>} : vector<16x32xf32>, vector<32x32xf32>, vector<16x32xf32> -> vector<16x32xf32>
    %c0_22 = arith.constant 0 : index
    %c0_23 = arith.constant 0 : index
    %38 = vector.load %arg7[%c0_22, %c0_23] : memref<1x32xf32, #tpu.memory_space<vmem>>, vector<1x32xf32>
    %39 = vector.broadcast %38 : vector<1x32xf32> to vector<16x32xf32>
    %40 = arith.addf %37, %39 : vector<16x32xf32>
    %41 = arith.addf %1, %40 : vector<16x32xf32>
    %c0_24 = arith.constant 0 : index
    %c0_25 = arith.constant 0 : index
    %42 = vector.load %arg8[%c0_24, %c0_25] : memref<1x32xf32, #tpu.memory_space<vmem>>, vector<1x32xf32>
    %c0_26 = arith.constant 0 : index
    %c0_27 = arith.constant 0 : index
    %43 = vector.load %arg9[%c0_26, %c0_27] : memref<1x32xf32, #tpu.memory_space<vmem>>, vector<1x32xf32>
    %cst_28 = arith.constant dense<0.000000e+00> : vector<16xf32>
    %44 = vector.multi_reduction <add>, %41, %cst_28 [1] : vector<16x32xf32> to vector<16xf32>
    %45 = vector.shape_cast %44 : vector<16xf32> to vector<16x1xf32>
    %cst_29 = arith.constant 3.200000e+01 : f32
    %46 = vector.broadcast %cst_29 : f32 to vector<16x1xf32>
    %47 = arith.divf %45, %46 : vector<16x1xf32>
    %48 = vector.broadcast %47 : vector<16x1xf32> to vector<16x32xf32>
    %49 = arith.subf %41, %48 : vector<16x32xf32>
    %50 = arith.mulf %49, %49 : vector<16x32xf32>
    %cst_30 = arith.constant dense<0.000000e+00> : vector<16xf32>
    %51 = vector.multi_reduction <add>, %50, %cst_30 [1] : vector<16x32xf32> to vector<16xf32>
    %52 = vector.shape_cast %51 : vector<16xf32> to vector<16x1xf32>
    %cst_31 = arith.constant 3.200000e+01 : f32
    %53 = vector.broadcast %cst_31 : f32 to vector<16x1xf32>
    %54 = arith.divf %52, %53 : vector<16x1xf32>
    %55 = vector.broadcast %47 : vector<16x1xf32> to vector<16x32xf32>
    %56 = arith.subf %41, %55 : vector<16x32xf32>
    %cst_32 = arith.constant 9.99999996E-13 : f32
    %57 = vector.broadcast %cst_32 : f32 to vector<16x1xf32>
    %58 = arith.addf %54, %57 : vector<16x1xf32>
    %59 = math.rsqrt %58 : vector<16x1xf32>
    %60 = vector.broadcast %59 : vector<16x1xf32> to vector<16x32xf32>
    %61 = arith.mulf %56, %60 : vector<16x32xf32>
    %62 = vector.broadcast %42 : vector<1x32xf32> to vector<16x32xf32>
    %63 = arith.mulf %61, %62 : vector<16x32xf32>
    %64 = vector.broadcast %43 : vector<1x32xf32> to vector<16x32xf32>
    %65 = arith.addf %63, %64 : vector<16x32xf32>
    %c0_33 = arith.constant 0 : index
    %c0_34 = arith.constant 0 : index
    %66 = vector.load %arg10[%c0_33, %c0_34] : memref<32x64xf32, #tpu.memory_space<vmem>>, vector<32x64xf32>
    %cst_35 = arith.constant dense<0.000000e+00> : vector<16x64xf32>
    %67 = tpu.matmul %65, %66, %cst_35 {dimension_numbers = #tpu.dot_dimension_numbers<[1], [0], [0], [1], [0, 0, 1, 1], [], []>} : vector<16x32xf32>, vector<32x64xf32>, vector<16x64xf32> -> vector<16x64xf32>
    %c0_36 = arith.constant 0 : index
    %c0_37 = arith.constant 0 : index
    %68 = vector.load %arg11[%c0_36, %c0_37] : memref<1x64xf32, #tpu.memory_space<vmem>>, vector<1x64xf32>
    %69 = vector.broadcast %68 : vector<1x64xf32> to vector<16x64xf32>
    %70 = arith.addf %67, %69 : vector<16x64xf32>
    %71 = arith.mulf %70, %70 : vector<16x64xf32>
    %72 = arith.mulf %70, %71 : vector<16x64xf32>
    %cst_38 = arith.constant 4.471500e-02 : f32
    %73 = vector.broadcast %cst_38 : f32 to vector<16x64xf32>
    %74 = arith.mulf %73, %72 : vector<16x64xf32>
    %75 = arith.addf %70, %74 : vector<16x64xf32>
    %cst_39 = arith.constant 0.797884583 : f32
    %76 = vector.broadcast %cst_39 : f32 to vector<16x64xf32>
    %77 = arith.mulf %76, %75 : vector<16x64xf32>
    %78 = math.tanh %77 : vector<16x64xf32>
    %cst_40 = arith.constant 1.000000e+00 : f32
    %79 = vector.broadcast %cst_40 : f32 to vector<16x64xf32>
    %80 = arith.addf %79, %78 : vector<16x64xf32>
    %cst_41 = arith.constant 5.000000e-01 : f32
    %81 = vector.broadcast %cst_41 : f32 to vector<16x64xf32>
    %82 = arith.mulf %81, %80 : vector<16x64xf32>
    %83 = arith.mulf %70, %82 : vector<16x64xf32>
    %c0_42 = arith.constant 0 : index
    %c0_43 = arith.constant 0 : index
    %84 = vector.load %arg12[%c0_42, %c0_43] : memref<64x32xf32, #tpu.memory_space<vmem>>, vector<64x32xf32>
    %cst_44 = arith.constant dense<0.000000e+00> : vector<16x32xf32>
    %85 = tpu.matmul %83, %84, %cst_44 {dimension_numbers = #tpu.dot_dimension_numbers<[1], [0], [0], [1], [0, 0, 1, 1], [], []>} : vector<16x64xf32>, vector<64x32xf32>, vector<16x32xf32> -> vector<16x32xf32>
    %c0_45 = arith.constant 0 : index
    %c0_46 = arith.constant 0 : index
    %86 = vector.load %arg13[%c0_45, %c0_46] : memref<1x32xf32, #tpu.memory_space<vmem>>, vector<1x32xf32>
    %87 = vector.broadcast %86 : vector<1x32xf32> to vector<16x32xf32>
    %88 = arith.addf %85, %87 : vector<16x32xf32>
    %89 = arith.addf %88, %65 : vector<16x32xf32>
    %c0_47 = arith.constant 0 : index
    %c0_48 = arith.constant 0 : index
    %90 = vector.load %arg14[%c0_47, %c0_48] : memref<1x32xf32, #tpu.memory_space<vmem>>, vector<1x32xf32>
    %c0_49 = arith.constant 0 : index
    %c0_50 = arith.constant 0 : index
    %91 = vector.load %arg15[%c0_49, %c0_50] : memref<1x32xf32, #tpu.memory_space<vmem>>, vector<1x32xf32>
    %cst_51 = arith.constant dense<0.000000e+00> : vector<16xf32>
    %92 = vector.multi_reduction <add>, %89, %cst_51 [1] : vector<16x32xf32> to vector<16xf32>
    %93 = vector.shape_cast %92 : vector<16xf32> to vector<16x1xf32>
    %cst_52 = arith.constant 3.200000e+01 : f32
    %94 = vector.broadcast %cst_52 : f32 to vector<16x1xf32>
    %95 = arith.divf %93, %94 : vector<16x1xf32>
    %96 = vector.broadcast %95 : vector<16x1xf32> to vector<16x32xf32>
    %97 = arith.subf %89, %96 : vector<16x32xf32>
    %98 = arith.mulf %97, %97 : vector<16x32xf32>
    %cst_53 = arith.constant dense<0.000000e+00> : vector<16xf32>
    %99 = vector.multi_reduction <add>, %98, %cst_53 [1] : vector<16x32xf32> to vector<16xf32>
    %100 = vector.shape_cast %99 : vector<16xf32> to vector<16x1xf32>
    %cst_54 = arith.constant 3.200000e+01 : f32
    %101 = vector.broadcast %cst_54 : f32 to vector<16x1xf32>
    %102 = arith.divf %100, %101 : vector<16x1xf32>
    %103 = vector.broadcast %95 : vector<16x1xf32> to vector<16x32xf32>
    %104 = arith.subf %89, %103 : vector<16x32xf32>
    %cst_55 = arith.constant 9.99999996E-13 : f32
    %105 = vector.broadcast %cst_55 : f32 to vector<16x1xf32>
    %106 = arith.addf %102, %105 : vector<16x1xf32>
    %107 = math.rsqrt %106 : vector<16x1xf32>
    %108 = vector.broadcast %107 : vector<16x1xf32> to vector<16x32xf32>
    %109 = arith.mulf %104, %108 : vector<16x32xf32>
    %110 = vector.broadcast %90 : vector<1x32xf32> to vector<16x32xf32>
    %111 = arith.mulf %109, %110 : vector<16x32xf32>
    %112 = vector.broadcast %91 : vector<1x32xf32> to vector<16x32xf32>
    %113 = arith.addf %111, %112 : vector<16x32xf32>
    %c0_56 = arith.constant 0 : index
    %c0_57 = arith.constant 0 : index
    %114 = vector.load %arg16[%c0_56, %c0_57] : memref<16x32xf32, #tpu.memory_space<vmem>>, vector<16x32xf32>
    tpu.vector_store %arg16[%c0_56, %c0_57], %113 {strides = array<i32>} : memref<16x32xf32, #tpu.memory_space<vmem>>, vector<16x32xf32>,
    return
  }
}

</mosaic_0001>

<llo_original>
// kernel: tpu_custom_call.1
$region0: #{tpu_custom_call.1}
  #allocation0 [shape = 'u32[]', space=smem, size = 0x4, offset = 0x4, fixed_abs, tag = 'smem constant byte address 0x4 - core index']
  #allocation1 [shape = 'u32[144,128]{1,0:T(1,128)}', space=vmem, size = 0x12000, scoped, tag = 'internal scratch']
  %s0 = inlined_call_operand.hbm [shape: f32[2,8,32], index: 0, kind: input, shape index: {}]
  %s1 = inlined_call_operand.hbm [shape: f32[16,32], index: 1, kind: input, shape index: {}]
  %s2 = inlined_call_operand.vmem [shape: f32[1,32,32], index: 2, kind: input, shape index: {}]
  %s3 = inlined_call_operand.vmem [shape: f32[32,32], index: 3, kind: input, shape index: {}]
  %s4 = inlined_call_operand.vmem [shape: f32[32,96], index: 4, kind: input, shape index: {}]
  %s5 = inlined_call_operand.vmem [shape: f32[1,96], index: 5, kind: input, shape index: {}]
  %s6 = inlined_call_operand.hbm [shape: f32[32,32], index: 6, kind: input, shape index: {}]
  %s7 = inlined_call_operand.vmem [shape: f32[1,32], index: 7, kind: input, shape index: {}]
  %s8 = inlined_call_operand.vmem [shape: f32[1,32], index: 8, kind: input, shape index: {}]
  %s9 = inlined_call_operand.vmem [shape: f32[1,32], index: 9, kind: input, shape index: {}]
  %s10 = inlined_call_operand.hbm [shape: f32[32,64], index: 10, kind: input, shape index: {}]
  %s11 = inlined_call_operand.vmem [shape: f32[1,64], index: 11, kind: input, shape index: {}]
  %s12 = inlined_call_operand.vmem [shape: f32[64,32], index: 12, kind: input, shape index: {}]
  %s13 = inlined_call_operand.vmem [shape: f32[1,32], index: 13, kind: input, shape index: {}]
  %s14 = inlined_call_operand.vmem [shape: f32[1,32], index: 14, kind: input, shape index: {}]
  %s15 = inlined_call_operand.vmem [shape: f32[1,32], index: 15, kind: input, shape index: {}]
  %s16 = inlined_call_operand.hbm [shape: f32[16,32], index: 16, kind: output, shape index: {0}]
  %s17 = inlined_call_operand.hbm [shape: f32[16,32], index: 17, kind: output, shape index: {1}]
  %18 = xla_tuple %s16, %s17
  %s19 = sld [smem:[#allocation0]]
  $region98: #{tpu_custom_call.1} parent=0
    _
  %s21 = ssub.s32 1, %s19
  %s22 = scalar_select 0, %s21, %s19
  $region1: #{tpu_custom_call.1} parent=0
    #allocation2 [shape = 'u8[8192]{0}', space=vmem, size = 0x2000, scoped, tag = 'input window, operand 0, single buffered']
    #allocation3 [shape = 's32[1]{0}', space=sflag, size = 0x4, scoped, tag = 'scoped memory for tpu_custom_call.1']
    #allocation4 [shape = 's32[1]{0}', space=sflag, size = 0x4, scoped, tag = 'scoped memory for tpu_custom_call.1']
    #allocation5 [shape = 'u8[8192]{0}', space=vmem, size = 0x2000, scoped, tag = 'input window, operand 1, single buffered']
    #allocation6 [shape = 's32[1]{0}', space=sflag, size = 0x4, scoped, tag = 'scoped memory for tpu_custom_call.1']
    #allocation7 [shape = 'u8[16384]{0}', space=vmem, size = 0x4000, scoped, tag = 'input window, operand 6, single buffered']
    #allocation8 [shape = 'u8[16384]{0}', space=vmem, size = 0x4000, scoped, tag = 'input window, operand 10, single buffered']
    #allocation9 [shape = 's32[1]{0}', space=sflag, size = 0x4, scoped, tag = 'scoped memory for tpu_custom_call.1']
    #allocation10 [shape = 'u8[8192]{0}', space=vmem, size = 0x2000, scoped, tag = 'output window, operand 0, single buffered']
    #allocation11 [shape = 'u8[8192]{0}', space=vmem, size = 0x2000, scoped, tag = 'output window, operand 1, single buffered']
    #allocation12 [shape = 's32[1]{0}', space=sflag, size = 0x4, scoped, tag = 'scoped memory for tpu_custom_call.1']
    %23 = vsyncpa [#allocation3], 0
    %24 = vsyncpa [#allocation6], 0
    %25 = vsyncpa [#allocation9], 0
    %26 = vsyncpa [#allocation4], 0
    %27 = vsyncpa [#allocation12], 0
    // Predicated region
    $region2: #{tpu_custom_call.1} parent=1 // pred_check
      _
    $region3: #{tpu_custom_call.1} parent=1 // pred_check_branch
      %29 = sbr.rel (0) target = $region5
    $region4: #{tpu_custom_call.1} parent=1 // pred_region
      %s31 = ssub.s32 256, 256
      %32 = vsyncadd [#allocation3], %s31
      %s33 = sshll.u32 [#allocation2], 4
      %s34 = int_to_ptr.vmem [resolvable:$true] %s33
      %39 = dma.hbm_to_vmem [thread:$0]  %s0, 256, %s34, [#allocation3], 128, 128, 8
    $region5: #{tpu_custom_call.1} parent=1 // pred_fallthru
      _
    // Predicated region
    $region6: #{tpu_custom_call.1} parent=1 // pred_check
      _
    $region7: #{tpu_custom_call.1} parent=1 // pred_check_branch
      %41 = sbr.rel (0) target = $region9
    $region8: #{tpu_custom_call.1} parent=1 // pred_region
      %s43 = ssub.s32 256, 256
      %44 = vsyncadd [#allocation6], %s43
      %s45 = sshll.u32 [#allocation5], 4
      %s46 = int_to_ptr.vmem [resolvable:$true] %s45
      %51 = dma.hbm_to_vmem [thread:$0]  %s1, 256, %s46, [#allocation6], 128, 128, 8
    $region9: #{tpu_custom_call.1} parent=1 // pred_fallthru
      _
    // Predicated region
    $region10: #{tpu_custom_call.1} parent=1 // pred_check
      _
    $region11: #{tpu_custom_call.1} parent=1 // pred_check_branch
      %53 = sbr.rel (0) target = $region13
    $region12: #{tpu_custom_call.1} parent=1 // pred_region
      _
    $region13: #{tpu_custom_call.1} parent=1 // pred_fallthru
      _
    // Predicated region
    $region14: #{tpu_custom_call.1} parent=1 // pred_check
      _
    $region15: #{tpu_custom_call.1} parent=1 // pred_check_branch
      %55 = sbr.rel (0) target = $region17
    $region16: #{tpu_custom_call.1} parent=1 // pred_region
      _
    $region17: #{tpu_custom_call.1} parent=1 // pred_fallthru
      _
    // Predicated region
    $region18: #{tpu_custom_call.1} parent=1 // pred_check
      _
    $region19: #{tpu_custom_call.1} parent=1 // pred_check_branch
      %57 = sbr.rel (0) target = $region21
    $region20: #{tpu_custom_call.1} parent=1 // pred_region
      _
    $region21: #{tpu_custom_call.1} parent=1 // pred_fallthru
      _
    // Predicated region
    $region22: #{tpu_custom_call.1} parent=1 // pred_check
      _
    $region23: #{tpu_custom_call.1} parent=1 // pred_check_branch
      %59 = sbr.rel (0) target = $region25
    $region24: #{tpu_custom_call.1} parent=1 // pred_region
      _
    $region25: #{tpu_custom_call.1} parent=1 // pred_fallthru
      _
    // Predicated region
    $region26: #{tpu_custom_call.1} parent=1 // pred_check
      _
    $region27: #{tpu_custom_call.1} parent=1 // pred_check_branch
      %61 = sbr.rel (0) target = $region29
    $region28: #{tpu_custom_call.1} parent=1 // pred_region
      %s63 = ssub.s32 512, 512
      %64 = vsyncadd [#allocation6], %s63
      %s65 = sshll.u32 [#allocation7], 4
      %s66 = int_to_ptr.vmem [resolvable:$true] %s65
      %71 = dma.hbm_to_vmem [thread:$0]  %s6, 512, %s66, [#allocation6], 128, 128, 8
    $region29: #{tpu_custom_call.1} parent=1 // pred_fallthru
      _
    // Predicated region
    $region30: #{tpu_custom_call.1} parent=1 // pred_check
      _
    $region31: #{tpu_custom_call.1} parent=1 // pred_check_branch
      %73 = sbr.rel (0) target = $region33
    $region32: #{tpu_custom_call.1} parent=1 // pred_region
      _
    $region33: #{tpu_custom_call.1} parent=1 // pred_fallthru
      _
    // Predicated region
    $region34: #{tpu_custom_call.1} parent=1 // pred_check
      _
    $region35: #{tpu_custom_call.1} parent=1 // pred_check_branch
      %75 = sbr.rel (0) target = $region37
    $region36: #{tpu_custom_call.1} parent=1 // pred_region
      _
    $region37: #{tpu_custom_call.1} parent=1 // pred_fallthru
      _
    // Predicated region
    $region38: #{tpu_custom_call.1} parent=1 // pred_check
      _
    $region39: #{tpu_custom_call.1} parent=1 // pred_check_branch
      %77 = sbr.rel (0) target = $region41
    $region40: #{tpu_custom_call.1} parent=1 // pred_region
      _
    $region41: #{tpu_custom_call.1} parent=1 // pred_fallthru
      _
    // Predicated region
    $region42: #{tpu_custom_call.1} parent=1 // pred_check
      _
    $region43: #{tpu_custom_call.1} parent=1 // pred_check_branch
      %79 = sbr.rel (0) target = $region45
    $region44: #{tpu_custom_call.1} parent=1 // pred_region
      %s81 = ssub.s32 512, 512
      %82 = vsyncadd [#allocation9], %s81
      %s83 = sshll.u32 [#allocation8], 4
      %s84 = int_to_ptr.vmem [resolvable:$true] %s83
      %89 = dma.hbm_to_vmem [thread:$0]  %s10, 512, %s84, [#allocation9], 128, 128, 8
    $region45: #{tpu_custom_call.1} parent=1 // pred_fallthru
      _
    // Predicated region
    $region46: #{tpu_custom_call.1} parent=1 // pred_check
      _
    $region47: #{tpu_custom_call.1} parent=1 // pred_check_branch
      %91 = sbr.rel (0) target = $region49
    $region48: #{tpu_custom_call.1} parent=1 // pred_region
      _
    $region49: #{tpu_custom_call.1} parent=1 // pred_fallthru
      _
    // Predicated region
    $region50: #{tpu_custom_call.1} parent=1 // pred_check
      _
    $region51: #{tpu_custom_call.1} parent=1 // pred_check_branch
      %93 = sbr.rel (0) target = $region53
    $region52: #{tpu_custom_call.1} parent=1 // pred_region
      _
    $region53: #{tpu_custom_call.1} parent=1 // pred_fallthru
      _
    // Predicated region
    $region54: #{tpu_custom_call.1} parent=1 // pred_check
      _
    $region55: #{tpu_custom_call.1} parent=1 // pred_check_branch
      %95 = sbr.rel (0) target = $region57
    $region56: #{tpu_custom_call.1} parent=1 // pred_region
      _
    $region57: #{tpu_custom_call.1} parent=1 // pred_fallthru
      _
    // Predicated region
    $region58: #{tpu_custom_call.1} parent=1 // pred_check
      _
    $region59: #{tpu_custom_call.1} parent=1 // pred_check_branch
      %97 = sbr.rel (0) target = $region61
    $region60: #{tpu_custom_call.1} parent=1 // pred_region
      _
    $region61: #{tpu_custom_call.1} parent=1 // pred_fallthru
      _
    // Predicated region
    $region62: #{tpu_custom_call.1} parent=1 // pred_check
      _
    $region63: #{tpu_custom_call.1} parent=1 // pred_check_branch
      %99 = sbr.rel (0) target = $region65
    $region64: #{tpu_custom_call.1} parent=1 // pred_region
      _
    $region65: #{tpu_custom_call.1} parent=1 // pred_fallthru
      _
    // Predicated region
    $region66: #{tpu_custom_call.1} parent=1 // pred_check
      _
    $region67: #{tpu_custom_call.1} parent=1 // pred_check_branch
      %101 = sbr.rel (0) target = $region69
    $region68: #{tpu_custom_call.1} parent=1 // pred_region
      %102 = dma.done [#allocation3], 256
    $region69: #{tpu_custom_call.1} parent=1 // pred_fallthru
      _
    // Predicated region
    $region70: #{tpu_custom_call.1} parent=1 // pred_check
      _
    $region71: #{tpu_custom_call.1} parent=1 // pred_check_branch
      %104 = sbr.rel (0) target = $region73
    $region72: #{tpu_custom_call.1} parent=1 // pred_region
      %105 = dma.done [#allocation6], 256
    $region73: #{tpu_custom_call.1} parent=1 // pred_fallthru
      _
    // Predicated region
    $region74: #{tpu_custom_call.1} parent=1 // pred_check
      _
    $region75: #{tpu_custom_call.1} parent=1 // pred_check_branch
      %107 = sbr.rel (0) target = $region77
    $region76: #{tpu_custom_call.1} parent=1 // pred_region
      %108 = dma.done [#allocation6], 512
    $region77: #{tpu_custom_call.1} parent=1 // pred_fallthru
      _
    // Predicated region
    $region78: #{tpu_custom_call.1} parent=1 // pred_check
      _
    $region79: #{tpu_custom_call.1} parent=1 // pred_check_branch
      %110 = sbr.rel (0) target = $region81
    $region80: #{tpu_custom_call.1} parent=1 // pred_region
      %111 = dma.done [#allocation9], 512
    $region81: #{tpu_custom_call.1} parent=1 // pred_fallthru
      _
    %v112 = vld [vmem:[#allocation2] sm:$0xff]
    %v113 = vld [vmem:[#allocation2 + $0x8] sm:$0xff]
    %v114 = vld [vmem:[%s4] sm:$0xff]
    %v115 = vld [vmem:[%s4 + $0x8] sm:$0xff]
    %v116 = vld [vmem:[%s4 + $0x10] sm:$0xff]
    %v117 = vld [vmem:[%s4 + $0x18] sm:$0xff]
    %v118 = vld [vmem:[%s5] sm:$0x1]
    %v120 = vlaneseq
    %v121 = vshrl.u32 %v120, 7
    %v122 = vsub.s32 0, %v121
    %v123 = vrot.slane %v118, %v122
    %vm125 = vcmask 261120
    %v127 = vsel %vm125, %v112, 0
    %v130 = vsel %vm125, %v113, 0
    %132 = vmatprep.subr.mxu0 0.0
    %133 = vmatpush1.msra.mxu0 0.0
    %134 = vmatprep.subr.mxu0 0.0
    %135 = vmatpush1.msra.mxu0 0.0
    %136 = vmatprep.subr.mxu0 0.0
    %137 = vmatpush1.msra.mxu0 0.0
    %138 = vmatprep.subr.mxu0 0.0
    %139 = vmatpush1.msra.mxu0 0.0
    %140 = vmatprep.subr.mxu0 0.0
    %141 = vmatpush1.msra.mxu0 0.0
    %142 = vmatprep.subr.mxu0 0.0
    %143 = vmatpush1.msra.mxu0 0.0
    %144 = vmatprep.subr.mxu0 0.0
    %145 = vmatpush1.msra.mxu0 0.0
    %146 = vmatprep.subr.mxu0 0.0
    %147 = vmatpush1.msra.mxu0 0.0
    %148 = vmatprep.subr.mxu0 0.0
    %149 = vmatpush1.msra.mxu0 0.0
    %150 = vmatprep.subr.mxu0 0.0
    %151 = vmatpush1.msra.mxu0 0.0
    %152 = vmatprep.subr.mxu0 0.0
    %153 = vmatpush1.msra.mxu0 0.0
    %154 = vmatprep.subr.mxu0 0.0
    %155 = vmatpush1.msra.mxu0 0.0
    %156 = vmatprep.subr.mxu0 0.0
    %157 = vmatpush1.msra.mxu0 %v117
    %158 = vmatprep.subr.mxu0 0.0
    %159 = vmatpush1.msra.mxu0 %v116
    %160 = vmatprep.subr.mxu0 0.0
    %161 = vmatpush1.msra.mxu0 %v115
    %162 = vmatprep.subr.mxu0 0.0
    %163 = vmatpush1.msra.mxu0 %v114
    %164 = vmatprep.subr.mxu0 0.0
    %165 = vmatpush2.msra.mxu0 0.0
    %166 = vmatprep.subr.mxu0 0.0
    %167 = vmatpush2.msra.mxu0 0.0
    %168 = vmatprep.subr.mxu0 0.0
    %169 = vmatpush2.msra.mxu0 0.0
    %170 = vmatprep.subr.mxu0 0.0
    %171 = vmatpush2.msra.mxu0 0.0
    %172 = vmatprep.subr.mxu0 0.0
    %173 = vmatpush2.msra.mxu0 0.0
    %174 = vmatprep.subr.mxu0 0.0
    %175 = vmatpush2.msra.mxu0 0.0
    %176 = vmatprep.subr.mxu0 0.0
    %177 = vmatpush2.msra.mxu0 0.0
    %178 = vmatprep.subr.mxu0 0.0
    %179 = vmatpush2.msra.mxu0 0.0
    %180 = vmatprep.subr.mxu0 0.0
    %181 = vmatpush2.msra.mxu0 0.0
    %182 = vmatprep.subr.mxu0 0.0
    %183 = vmatpush2.msra.mxu0 0.0
    %184 = vmatprep.subr.mxu0 0.0
    %185 = vmatpush2.msra.mxu0 0.0
    %186 = vmatprep.subr.mxu0 0.0
    %187 = vmatpush2.msra.mxu0 0.0
    %188 = vmatprep.subr.mxu0 0.0
    %189 = vmatpush2.msra.mxu0 0.0
    %190 = vmatprep.subr.mxu0 0.0
    %191 = vmatpush2.msra.mxu0 0.0
    %192 = vmatprep.subr.mxu0 0.0
    %193 = vmatpush2.msra.mxu0 0.0
    %194 = vmatprep.subr.mxu0 0.0
    %195 = vmatpush2.msra.mxu0 0.0
    %196 = vmatprep.mubr.f32.mxu0 0.0
    %197 = vmatmul.mubr.f32.gmra.mxu0 %v127
    %v198 = vpop.f32.mrf.mxu0
    %v199 = vadd.f32 %v123, %v198
    %v200 = vpop.f32.mrf.mxu0
    %201 = vmatprep.mubr.f32.mxu0 0.0
    %202 = vmatmul.mubr.f32.gmra.mxu0 %v130
    %v203 = vpop.f32.mrf.mxu0
    %v204 = vadd.f32 %v123, %v203
    %v205 = vpop.f32.mrf.mxu0
    %206 = vdwg.mxu0
    %v207 = vld [vmem:[%s2] sm:$0xff]
    %v208 = vld [vmem:[%s2 + $0x8] sm:$0xff]
    %v209 = vld [vmem:[%s2 + $0x10] sm:$0xff]
    %v210 = vld [vmem:[%s2 + $0x18] sm:$0xff]
    %215 = vrot.lane.b32.xlu0 %v207, 32
    %v216 = vpop.permute.xlu0 %215
    %217 = vrot.lane.b32.xlu0 %v208, 32
    %v218 = vpop.permute.xlu0 %217
    %219 = vrot.lane.b32.xlu0 %v209, 32
    %v220 = vpop.permute.xlu0 %219
    %221 = vrot.lane.b32.xlu0 %v210, 32
    %v222 = vpop.permute.xlu0 %221
    %v227 = vmul.f32 %v199, %v216
    %v228 = vmul.f32 %v199, %v218
    %v229 = vmul.f32 %v199, %v220
    %v230 = vmul.f32 %v199, %v222
    %v231 = vmul.f32 %v204, %v216
    %v232 = vmul.f32 %v204, %v218
    %v233 = vmul.f32 %v204, %v220
    %v234 = vmul.f32 %v204, %v222
    %235 = vrot.lane.b32.xlu0 %v207, 64
    %v236 = vpop.permute.xlu0 %235
    %237 = vrot.lane.b32.xlu0 %v208, 64
    %v238 = vpop.permute.xlu0 %237
    %239 = vrot.lane.b32.xlu0 %v209, 64
    %v240 = vpop.permute.xlu0 %239
    %241 = vrot.lane.b32.xlu0 %v210, 64
    %v242 = vpop.permute.xlu0 %241
    %v247 = vmul.f32 %v199, %v236
    %v248 = vmul.f32 %v199, %v238
    %v249 = vmul.f32 %v199, %v240
    %v250 = vmul.f32 %v199, %v242
    %v251 = vmul.f32 %v204, %v236
    %v252 = vmul.f32 %v204, %v238
    %v253 = vmul.f32 %v204, %v240
    %v254 = vmul.f32 %v204, %v242
    %259 = vrot.lane.b32.xlu0 %v227, 96
    %v260 = vpop.permute.xlu0 %259
    %261 = vrot.lane.b32.xlu0 %v228, 96
    %v262 = vpop.permute.xlu0 %261
    %263 = vrot.lane.b32.xlu0 %v229, 96
    %v264 = vpop.permute.xlu0 %263
    %265 = vrot.lane.b32.xlu0 %v230, 96
    %v266 = vpop.permute.xlu0 %265
    %v268 = vsel %vm125, %v199, 0
    %v270 = vsel %vm125, %v260, 0
    %v272 = vsel %vm125, %v262, 0
    %v274 = vsel %vm125, %v264, 0
    %v276 = vsel %vm125, %v266, 0
    %278 = vmatprep.subr.mxu0 0.0
    %279 = vmatpush1.xpose.msra.mxu0 0.0
    %280 = vmatprep.subr.mxu0 0.0
    %281 = vmatpush1.xpose.msra.mxu0 0.0
    %282 = vmatprep.subr.mxu0 0.0
    %283 = vmatpush1.xpose.msra.mxu0 0.0
    %284 = vmatprep.subr.mxu0 0.0
    %285 = vmatpush1.xpose.msra.mxu0 0.0
    %286 = vmatprep.subr.mxu0 0.0
    %287 = vmatpush1.xpose.msra.mxu0 0.0
    %288 = vmatprep.subr.mxu0 0.0
    %289 = vmatpush1.xpose.msra.mxu0 0.0
    %290 = vmatprep.subr.mxu0 0.0
    %291 = vmatpush1.xpose.msra.mxu0 0.0
    %292 = vmatprep.subr.mxu0 0.0
    %293 = vmatpush1.xpose.msra.mxu0 0.0
    %294 = vmatprep.subr.mxu0 0.0
    %295 = vmatpush1.xpose.msra.mxu0 0.0
    %296 = vmatprep.subr.mxu0 0.0
    %297 = vmatpush1.xpose.msra.mxu0 0.0
    %298 = vmatprep.subr.mxu0 0.0
    %299 = vmatpush1.xpose.msra.mxu0 0.0
    %300 = vmatprep.subr.mxu0 0.0
    %301 = vmatpush1.xpose.msra.mxu0 0.0
    %302 = vmatprep.subr.mxu0 0.0
    %303 = vmatpush1.xpose.msra.mxu0 %v276
    %304 = vmatprep.subr.mxu0 0.0
    %305 = vmatpush1.xpose.msra.mxu0 %v274
    %306 = vmatprep.subr.mxu0 0.0
    %307 = vmatpush1.xpose.msra.mxu0 %v272
    %308 = vmatprep.subr.mxu0 0.0
    %309 = vmatpush1.xpose.msra.mxu0 %v270
    %310 = vmatprep.subr.mxu0 0.0
    %311 = vmatpush2.xpose.msra.mxu0 0.0
    %312 = vmatprep.subr.mxu0 0.0
    %313 = vmatpush2.xpose.msra.mxu0 0.0
    %314 = vmatprep.subr.mxu0 0.0
    %315 = vmatpush2.xpose.msra.mxu0 0.0
    %316 = vmatprep.subr.mxu0 0.0
    %317 = vmatpush2.xpose.msra.mxu0 0.0
    %318 = vmatprep.subr.mxu0 0.0
    %319 = vmatpush2.xpose.msra.mxu0 0.0
    %320 = vmatprep.subr.mxu0 0.0
    %321 = vmatpush2.xpose.msra.mxu0 0.0
    %322 = vmatprep.subr.mxu0 0.0
    %323 = vmatpush2.xpose.msra.mxu0 0.0
    %324 = vmatprep.subr.mxu0 0.0
    %325 = vmatpush2.xpose.msra.mxu0 0.0
    %326 = vmatprep.subr.mxu0 0.0
    %327 = vmatpush2.xpose.msra.mxu0 0.0
    %328 = vmatprep.subr.mxu0 0.0
    %329 = vmatpush2.xpose.msra.mxu0 0.0
    %330 = vmatprep.subr.mxu0 0.0
    %331 = vmatpush2.xpose.msra.mxu0 0.0
    %332 = vmatprep.subr.mxu0 0.0
    %333 = vmatpush2.xpose.msra.mxu0 0.0
    %334 = vmatprep.subr.mxu0 0.0
    %335 = vmatpush2.xpose.msra.mxu0 0.0
    %336 = vmatprep.subr.mxu0 0.0
    %337 = vmatpush2.xpose.msra.mxu0 0.0
    %338 = vmatprep.subr.mxu0 0.0
    %339 = vmatpush2.xpose.msra.mxu0 0.0
    %340 = vmatprep.subr.mxu0 0.0
    %341 = vmatpush2.xpose.msra.mxu0 0.0
    %342 = vmatprep.mubr.f32.mxu0 0.0
    %343 = vmatmul.mubr.f32.gmra.mxu0 %v268
    %v344 = vpop.f32.mrf.mxu0
    %v345 = vadd.f32 0.0, %v344
    %v346 = vpop.f32.mrf.mxu0
    %347 = vdwg.mxu0
    %352 = vrot.lane.b32.xlu0 %v231, 96
    %v353 = vpop.permute.xlu0 %352
    %354 = vrot.lane.b32.xlu0 %v232, 96
    %v355 = vpop.permute.xlu0 %354
    %356 = vrot.lane.b32.xlu0 %v233, 96
    %v357 = vpop.permute.xlu0 %356
    %358 = vrot.lane.b32.xlu0 %v234, 96
    %v359 = vpop.permute.xlu0 %358
    %v361 = vsel %vm125, %v204, 0
    %v363 = vsel %vm125, %v353, 0
    %v365 = vsel %vm125, %v355, 0
    %v367 = vsel %vm125, %v357, 0
    %v369 = vsel %vm125, %v359, 0
    %371 = vmatprep.subr.mxu0 0.0
    %372 = vmatpush1.xpose.msra.mxu0 0.0
    %373 = vmatprep.subr.mxu0 0.0
    %374 = vmatpush1.xpose.msra.mxu0 0.0
    %375 = vmatprep.subr.mxu0 0.0
    %376 = vmatpush1.xpose.msra.mxu0 0.0
    %377 = vmatprep.subr.mxu0 0.0
    %378 = vmatpush1.xpose.msra.mxu0 0.0
    %379 = vmatprep.subr.mxu0 0.0
    %380 = vmatpush1.xpose.msra.mxu0 0.0
    %381 = vmatprep.subr.mxu0 0.0
    %382 = vmatpush1.xpose.msra.mxu0 0.0
    %383 = vmatprep.subr.mxu0 0.0
    %384 = vmatpush1.xpose.msra.mxu0 0.0
    %385 = vmatprep.subr.mxu0 0.0
    %386 = vmatpush1.xpose.msra.mxu0 0.0
    %387 = vmatprep.subr.mxu0 0.0
    %388 = vmatpush1.xpose.msra.mxu0 0.0
    %389 = vmatprep.subr.mxu0 0.0
    %390 = vmatpush1.xpose.msra.mxu0 0.0
    %391 = vmatprep.subr.mxu0 0.0
    %392 = vmatpush1.xpose.msra.mxu0 0.0
    %393 = vmatprep.subr.mxu0 0.0
    %394 = vmatpush1.xpose.msra.mxu0 0.0
    %395 = vmatprep.subr.mxu0 0.0
    %396 = vmatpush1.xpose.msra.mxu0 %v369
    %397 = vmatprep.subr.mxu0 0.0
    %398 = vmatpush1.xpose.msra.mxu0 %v367
    %399 = vmatprep.subr.mxu0 0.0
    %400 = vmatpush1.xpose.msra.mxu0 %v365
    %401 = vmatprep.subr.mxu0 0.0
    %402 = vmatpush1.xpose.msra.mxu0 %v363
    %403 = vmatprep.subr.mxu0 0.0
    %404 = vmatpush2.xpose.msra.mxu0 0.0
    %405 = vmatprep.subr.mxu0 0.0
    %406 = vmatpush2.xpose.msra.mxu0 0.0
    %407 = vmatprep.subr.mxu0 0.0
    %408 = vmatpush2.xpose.msra.mxu0 0.0
    %409 = vmatprep.subr.mxu0 0.0
    %410 = vmatpush2.xpose.msra.mxu0 0.0
    %411 = vmatprep.subr.mxu0 0.0
    %412 = vmatpush2.xpose.msra.mxu0 0.0
    %413 = vmatprep.subr.mxu0 0.0
    %414 = vmatpush2.xpose.msra.mxu0 0.0
    %415 = vmatprep.subr.mxu0 0.0
    %416 = vmatpush2.xpose.msra.mxu0 0.0
    %417 = vmatprep.subr.mxu0 0.0
    %418 = vmatpush2.xpose.msra.mxu0 0.0
    %419 = vmatprep.subr.mxu0 0.0
    %420 = vmatpush2.xpose.msra.mxu0 0.0
    %421 = vmatprep.subr.mxu0 0.0
    %422 = vmatpush2.xpose.msra.mxu0 0.0
    %423 = vmatprep.subr.mxu0 0.0
    %424 = vmatpush2.xpose.msra.mxu0 0.0
    %425 = vmatprep.subr.mxu0 0.0
    %426 = vmatpush2.xpose.msra.mxu0 0.0
    %427 = vmatprep.subr.mxu0 0.0
    %428 = vmatpush2.xpose.msra.mxu0 0.0
    %429 = vmatprep.subr.mxu0 0.0
    %430 = vmatpush2.xpose.msra.mxu0 0.0
    %431 = vmatprep.subr.mxu0 0.0
    %432 = vmatpush2.xpose.msra.mxu0 0.0
    %433 = vmatprep.subr.mxu0 0.0
    %434 = vmatpush2.xpose.msra.mxu0 0.0
    %435 = vmatprep.mubr.f32.mxu0 0.0
    %436 = vmatmul.mubr.f32.gmra.mxu0 %v361
    %v437 = vpop.f32.mrf.mxu0
    %v438 = vadd.f32 0.0, %v437
    %v439 = vpop.f32.mrf.mxu0
    %440 = vdwg.mxu0
    %v441 = vld [vmem:[#allocation5] sm:$0xff]
    %v442 = vld [vmem:[#allocation5 + $0x8] sm:$0xff]
    %v443 = vadd.f32 %v345, %v441
    %v444 = vadd.f32 %v438, %v442
    %v445 = vsel %vm125, %v443, -inf
    %446 = vmax.xlane.f32.xlu0 %v445
    %v447 = vpop.xlane.xlu0 %446
    %v448 = vsel %vm125, %v444, -inf
    %449 = vmax.xlane.f32.xlu0 %v448
    %v450 = vpop.xlane.xlu0 %449
    %v451 = vsub.f32 %v443, %v447
    %v452 = vsub.f32 %v444, %v450
    %v453 = vmul.f32 %v451, 1.442695
    %v454 = vpow.pop %v453
    %v455 = vmul.f32 %v452, 1.442695
    %v456 = vpow.pop %v455
    %v457 = vld [vmem:[%s3] sm:$0xff]
    %v458 = vld [vmem:[%s3 + $0x8] sm:$0xff]
    %v459 = vld [vmem:[%s3 + $0x10] sm:$0xff]
    %v460 = vld [vmem:[%s3 + $0x18] sm:$0xff]
    %v462 = vsel %vm125, %v454, 0
    %v465 = vsel %vm125, %v456, 0
    %467 = vmatprep.subr.mxu0 0.0
    %468 = vmatpush1.msra.mxu0 0.0
    %469 = vmatprep.subr.mxu0 0.0
    %470 = vmatpush1.msra.mxu0 0.0
    %471 = vmatprep.subr.mxu0 0.0
    %472 = vmatpush1.msra.mxu0 0.0
    %473 = vmatprep.subr.mxu0 0.0
    %474 = vmatpush1.msra.mxu0 0.0
    %475 = vmatprep.subr.mxu0 0.0
    %476 = vmatpush1.msra.mxu0 0.0
    %477 = vmatprep.subr.mxu0 0.0
    %478 = vmatpush1.msra.mxu0 0.0
    %479 = vmatprep.subr.mxu0 0.0
    %480 = vmatpush1.msra.mxu0 0.0
    %481 = vmatprep.subr.mxu0 0.0
    %482 = vmatpush1.msra.mxu0 0.0
    %483 = vmatprep.subr.mxu0 0.0
    %484 = vmatpush1.msra.mxu0 0.0
    %485 = vmatprep.subr.mxu0 0.0
    %486 = vmatpush1.msra.mxu0 0.0
    %487 = vmatprep.subr.mxu0 0.0
    %488 = vmatpush1.msra.mxu0 0.0
    %489 = vmatprep.subr.mxu0 0.0
    %490 = vmatpush1.msra.mxu0 0.0
    %491 = vmatprep.subr.mxu0 0.0
    %492 = vmatpush1.msra.mxu0 %v460
    %493 = vmatprep.subr.mxu0 0.0
    %494 = vmatpush1.msra.mxu0 %v459
    %495 = vmatprep.subr.mxu0 0.0
    %496 = vmatpush1.msra.mxu0 %v458
    %497 = vmatprep.subr.mxu0 0.0
    %498 = vmatpush1.msra.mxu0 %v457
    %499 = vmatprep.subr.mxu0 0.0
    %500 = vmatpush2.msra.mxu0 0.0
    %501 = vmatprep.subr.mxu0 0.0
    %502 = vmatpush2.msra.mxu0 0.0
    %503 = vmatprep.subr.mxu0 0.0
    %504 = vmatpush2.msra.mxu0 0.0
    %505 = vmatprep.subr.mxu0 0.0
    %506 = vmatpush2.msra.mxu0 0.0
    %507 = vmatprep.subr.mxu0 0.0
    %508 = vmatpush2.msra.mxu0 0.0
    %509 = vmatprep.subr.mxu0 0.0
    %510 = vmatpush2.msra.mxu0 0.0
    %511 = vmatprep.subr.mxu0 0.0
    %512 = vmatpush2.msra.mxu0 0.0
    %513 = vmatprep.subr.mxu0 0.0
    %514 = vmatpush2.msra.mxu0 0.0
    %515 = vmatprep.subr.mxu0 0.0
    %516 = vmatpush2.msra.mxu0 0.0
    %517 = vmatprep.subr.mxu0 0.0
    %518 = vmatpush2.msra.mxu0 0.0
    %519 = vmatprep.subr.mxu0 0.0
    %520 = vmatpush2.msra.mxu0 0.0
    %521 = vmatprep.subr.mxu0 0.0
    %522 = vmatpush2.msra.mxu0 0.0
    %523 = vmatprep.subr.mxu0 0.0
    %524 = vmatpush2.msra.mxu0 0.0
    %525 = vmatprep.subr.mxu0 0.0
    %526 = vmatpush2.msra.mxu0 0.0
    %527 = vmatprep.subr.mxu0 0.0
    %528 = vmatpush2.msra.mxu0 0.0
    %529 = vmatprep.subr.mxu0 0.0
    %530 = vmatpush2.msra.mxu0 0.0
    %531 = vmatprep.mubr.f32.mxu0 0.0
    %532 = vmatmul.mubr.f32.gmra.mxu0 %v462
    %v533 = vpop.f32.mrf.mxu0
    %v534 = vadd.f32 0.0, %v533
    %v535 = vpop.f32.mrf.mxu0
    %536 = vmatprep.mubr.f32.mxu0 0.0
    %537 = vmatmul.mubr.f32.gmra.mxu0 %v465
    %v538 = vpop.f32.mrf.mxu0
    %v539 = vadd.f32 0.0, %v538
    %v540 = vpop.f32.mrf.mxu0
    %541 = vdwg.mxu0
    %v542 = vrcp.pop %v534
    %v543 = vmul.f32 %v454, %v542
    %v544 = vrcp.pop %v539
    %v545 = vmul.f32 %v456, %v544
    %546 = vst.msk [vmem:[#allocation11] sm:$0xff] %vm125, %v543
    %547 = vst.msk [vmem:[#allocation11 + $0x8] sm:$0xff] %vm125, %v545
    %552 = vrot.lane.b32.xlu0 %v247, 64
    %v553 = vpop.permute.xlu0 %552
    %554 = vrot.lane.b32.xlu0 %v248, 64
    %v555 = vpop.permute.xlu0 %554
    %556 = vrot.lane.b32.xlu0 %v249, 64
    %v557 = vpop.permute.xlu0 %556
    %558 = vrot.lane.b32.xlu0 %v250, 64
    %v559 = vpop.permute.xlu0 %558
    %v565 = vsel %vm125, %v543, 0
    %567 = vmatprep.subr.mxu0 0.0
    %568 = vmatpush1.msra.mxu0 0.0
    %569 = vmatprep.subr.mxu0 0.0
    %570 = vmatpush1.msra.mxu0 0.0
    %571 = vmatprep.subr.mxu0 0.0
    %572 = vmatpush1.msra.mxu0 0.0
    %573 = vmatprep.subr.mxu0 0.0
    %574 = vmatpush1.msra.mxu0 0.0
    %575 = vmatprep.subr.mxu0 0.0
    %576 = vmatpush1.msra.mxu0 0.0
    %577 = vmatprep.subr.mxu0 0.0
    %578 = vmatpush1.msra.mxu0 0.0
    %579 = vmatprep.subr.mxu0 0.0
    %580 = vmatpush1.msra.mxu0 0.0
    %581 = vmatprep.subr.mxu0 0.0
    %582 = vmatpush1.msra.mxu0 0.0
    %583 = vmatprep.subr.mxu0 0.0
    %584 = vmatpush1.msra.mxu0 0.0
    %585 = vmatprep.subr.mxu0 0.0
    %586 = vmatpush1.msra.mxu0 0.0
    %587 = vmatprep.subr.mxu0 0.0
    %588 = vmatpush1.msra.mxu0 0.0
    %589 = vmatprep.subr.mxu0 0.0
    %590 = vmatpush1.msra.mxu0 0.0
    %591 = vmatprep.subr.mxu0 0.0
    %592 = vmatpush1.msra.mxu0 %v559
    %593 = vmatprep.subr.mxu0 0.0
    %594 = vmatpush1.msra.mxu0 %v557
    %595 = vmatprep.subr.mxu0 0.0
    %596 = vmatpush1.msra.mxu0 %v555
    %597 = vmatprep.subr.mxu0 0.0
    %598 = vmatpush1.msra.mxu0 %v553
    %599 = vmatprep.subr.mxu0 0.0
    %600 = vmatpush2.msra.mxu0 0.0
    %601 = vmatprep.subr.mxu0 0.0
    %602 = vmatpush2.msra.mxu0 0.0
    %603 = vmatprep.subr.mxu0 0.0
    %604 = vmatpush2.msra.mxu0 0.0
    %605 = vmatprep.subr.mxu0 0.0
    %606 = vmatpush2.msra.mxu0 0.0
    %607 = vmatprep.subr.mxu0 0.0
    %608 = vmatpush2.msra.mxu0 0.0
    %609 = vmatprep.subr.mxu0 0.0
    %610 = vmatpush2.msra.mxu0 0.0
    %611 = vmatprep.subr.mxu0 0.0
    %612 = vmatpush2.msra.mxu0 0.0
    %613 = vmatprep.subr.mxu0 0.0
    %614 = vmatpush2.msra.mxu0 0.0
    %615 = vmatprep.subr.mxu0 0.0
    %616 = vmatpush2.msra.mxu0 0.0
    %617 = vmatprep.subr.mxu0 0.0
    %618 = vmatpush2.msra.mxu0 0.0
    %619 = vmatprep.subr.mxu0 0.0
    %620 = vmatpush2.msra.mxu0 0.0
    %621 = vmatprep.subr.mxu0 0.0
    %622 = vmatpush2.msra.mxu0 0.0
    %623 = vmatprep.subr.mxu0 0.0
    %624 = vmatpush2.msra.mxu0 0.0
    %625 = vmatprep.subr.mxu0 0.0
    %626 = vmatpush2.msra.mxu0 0.0
    %627 = vmatprep.subr.mxu0 0.0
    %628 = vmatpush2.msra.mxu0 0.0
    %629 = vmatprep.subr.mxu0 0.0
    %630 = vmatpush2.msra.mxu0 0.0
    %631 = vmatprep.mubr.f32.mxu0 0.0
    %632 = vmatmul.mubr.f32.gmra.mxu0 %v565
    %v633 = vpop.f32.mrf.mxu0
    %v634 = vadd.f32 0.0, %v633
    %v635 = vpop.f32.mrf.mxu0
    %636 = vdwg.mxu0
    %641 = vrot.lane.b32.xlu0 %v251, 64
    %v642 = vpop.permute.xlu0 %641
    %643 = vrot.lane.b32.xlu0 %v252, 64
    %v644 = vpop.permute.xlu0 %643
    %645 = vrot.lane.b32.xlu0 %v253, 64
    %v646 = vpop.permute.xlu0 %645
    %647 = vrot.lane.b32.xlu0 %v254, 64
    %v648 = vpop.permute.xlu0 %647
    %v654 = vsel %vm125, %v545, 0
    %656 = vmatprep.subr.mxu0 0.0
    %657 = vmatpush1.msra.mxu0 0.0
    %658 = vmatprep.subr.mxu0 0.0
    %659 = vmatpush1.msra.mxu0 0.0
    %660 = vmatprep.subr.mxu0 0.0
    %661 = vmatpush1.msra.mxu0 0.0
    %662 = vmatprep.subr.mxu0 0.0
    %663 = vmatpush1.msra.mxu0 0.0
    %664 = vmatprep.subr.mxu0 0.0
    %665 = vmatpush1.msra.mxu0 0.0
    %666 = vmatprep.subr.mxu0 0.0
    %667 = vmatpush1.msra.mxu0 0.0
    %668 = vmatprep.subr.mxu0 0.0
    %669 = vmatpush1.msra.mxu0 0.0
    %670 = vmatprep.subr.mxu0 0.0
    %671 = vmatpush1.msra.mxu0 0.0
    %672 = vmatprep.subr.mxu0 0.0
    %673 = vmatpush1.msra.mxu0 0.0
    %674 = vmatprep.subr.mxu0 0.0
    %675 = vmatpush1.msra.mxu0 0.0
    %676 = vmatprep.subr.mxu0 0.0
    %677 = vmatpush1.msra.mxu0 0.0
    %678 = vmatprep.subr.mxu0 0.0
    %679 = vmatpush1.msra.mxu0 0.0
    %680 = vmatprep.subr.mxu0 0.0
    %681 = vmatpush1.msra.mxu0 %v648
    %682 = vmatprep.subr.mxu0 0.0
    %683 = vmatpush1.msra.mxu0 %v646
    %684 = vmatprep.subr.mxu0 0.0
    %685 = vmatpush1.msra.mxu0 %v644
    %686 = vmatprep.subr.mxu0 0.0
    %687 = vmatpush1.msra.mxu0 %v642
    %688 = vmatprep.subr.mxu0 0.0
    %689 = vmatpush2.msra.mxu0 0.0
    %690 = vmatprep.subr.mxu0 0.0
    %691 = vmatpush2.msra.mxu0 0.0
    %692 = vmatprep.subr.mxu0 0.0
    %693 = vmatpush2.msra.mxu0 0.0
    %694 = vmatprep.subr.mxu0 0.0
    %695 = vmatpush2.msra.mxu0 0.0
    %696 = vmatprep.subr.mxu0 0.0
    %697 = vmatpush2.msra.mxu0 0.0
    %698 = vmatprep.subr.mxu0 0.0
    %699 = vmatpush2.msra.mxu0 0.0
    %700 = vmatprep.subr.mxu0 0.0
    %701 = vmatpush2.msra.mxu0 0.0
    %702 = vmatprep.subr.mxu0 0.0
    %703 = vmatpush2.msra.mxu0 0.0
    %704 = vmatprep.subr.mxu0 0.0
    %705 = vmatpush2.msra.mxu0 0.0
    %706 = vmatprep.subr.mxu0 0.0
    %707 = vmatpush2.msra.mxu0 0.0
    %708 = vmatprep.subr.mxu0 0.0
    %709 = vmatpush2.msra.mxu0 0.0
    %710 = vmatprep.subr.mxu0 0.0
    %711 = vmatpush2.msra.mxu0 0.0
    %712 = vmatprep.subr.mxu0 0.0
    %713 = vmatpush2.msra.mxu0 0.0
    %714 = vmatprep.subr.mxu0 0.0
    %715 = vmatpush2.msra.mxu0 0.0
    %716 = vmatprep.subr.mxu0 0.0
    %717 = vmatpush2.msra.mxu0 0.0
    %718 = vmatprep.subr.mxu0 0.0
    %719 = vmatpush2.msra.mxu0 0.0
    %720 = vmatprep.mubr.f32.mxu0 0.0
    %721 = vmatmul.mubr.f32.gmra.mxu0 %v654
    %v722 = vpop.f32.mrf.mxu0
    %v723 = vadd.f32 0.0, %v722
    %v724 = vpop.f32.mrf.mxu0
    %725 = vdwg.mxu0
    %v726 = vld [vmem:[#allocation7] sm:$0xff]
    %v727 = vld [vmem:[#allocation7 + $0x8] sm:$0xff]
    %v728 = vld [vmem:[#allocation7 + $0x10] sm:$0xff]
    %v729 = vld [vmem:[#allocation7 + $0x18] sm:$0xff]
    %v730 = vld [vmem:[%s7] sm:$0x1]
    %v732 = vlaneseq
    %v733 = vshrl.u32 %v732, 7
    %v734 = vsub.s32 0, %v733
    %v735 = vrot.slane %v730, %v734
    %v738 = vsel %vm125, %v634, 0
    %v741 = vsel %vm125, %v723, 0
    %743 = vmatprep.subr.mxu0 0.0
    %744 = vmatpush1.msra.mxu0 0.0
    %745 = vmatprep.subr.mxu0 0.0
    %746 = vmatpush1.msra.mxu0 0.0
    %747 = vmatprep.subr.mxu0 0.0
    %748 = vmatpush1.msra.mxu0 0.0
    %749 = vmatprep.subr.mxu0 0.0
    %750 = vmatpush1.msra.mxu0 0.0
    %751 = vmatprep.subr.mxu0 0.0
    %752 = vmatpush1.msra.mxu0 0.0
    %753 = vmatprep.subr.mxu0 0.0
    %754 = vmatpush1.msra.mxu0 0.0
    %755 = vmatprep.subr.mxu0 0.0
    %756 = vmatpush1.msra.mxu0 0.0
    %757 = vmatprep.subr.mxu0 0.0
    %758 = vmatpush1.msra.mxu0 0.0
    %759 = vmatprep.subr.mxu0 0.0
    %760 = vmatpush1.msra.mxu0 0.0
    %761 = vmatprep.subr.mxu0 0.0
    %762 = vmatpush1.msra.mxu0 0.0
    %763 = vmatprep.subr.mxu0 0.0
    %764 = vmatpush1.msra.mxu0 0.0
    %765 = vmatprep.subr.mxu0 0.0
    %766 = vmatpush1.msra.mxu0 0.0
    %767 = vmatprep.subr.mxu0 0.0
    %768 = vmatpush1.msra.mxu0 %v729
    %769 = vmatprep.subr.mxu0 0.0
    %770 = vmatpush1.msra.mxu0 %v728
    %771 = vmatprep.subr.mxu0 0.0
    %772 = vmatpush1.msra.mxu0 %v727
    %773 = vmatprep.subr.mxu0 0.0
    %774 = vmatpush1.msra.mxu0 %v726
    %775 = vmatprep.subr.mxu0 0.0
    %776 = vmatpush2.msra.mxu0 0.0
    %777 = vmatprep.subr.mxu0 0.0
    %778 = vmatpush2.msra.mxu0 0.0
    %779 = vmatprep.subr.mxu0 0.0
    %780 = vmatpush2.msra.mxu0 0.0
    %781 = vmatprep.subr.mxu0 0.0
    %782 = vmatpush2.msra.mxu0 0.0
    %783 = vmatprep.subr.mxu0 0.0
    %784 = vmatpush2.msra.mxu0 0.0
    %785 = vmatprep.subr.mxu0 0.0
    %786 = vmatpush2.msra.mxu0 0.0
    %787 = vmatprep.subr.mxu0 0.0
    %788 = vmatpush2.msra.mxu0 0.0
    %789 = vmatprep.subr.mxu0 0.0
    %790 = vmatpush2.msra.mxu0 0.0
    %791 = vmatprep.subr.mxu0 0.0
    %792 = vmatpush2.msra.mxu0 0.0
    %793 = vmatprep.subr.mxu0 0.0
    %794 = vmatpush2.msra.mxu0 0.0
    %795 = vmatprep.subr.mxu0 0.0
    %796 = vmatpush2.msra.mxu0 0.0
    %797 = vmatprep.subr.mxu0 0.0
    %798 = vmatpush2.msra.mxu0 0.0
    %799 = vmatprep.subr.mxu0 0.0
    %800 = vmatpush2.msra.mxu0 0.0
    %801 = vmatprep.subr.mxu0 0.0
    %802 = vmatpush2.msra.mxu0 0.0
    %803 = vmatprep.subr.mxu0 0.0
    %804 = vmatpush2.msra.mxu0 0.0
    %805 = vmatprep.subr.mxu0 0.0
    %806 = vmatpush2.msra.mxu0 0.0
    %807 = vmatprep.mubr.f32.mxu0 0.0
    %808 = vmatmul.mubr.f32.gmra.mxu0 %v738
    %v809 = vpop.f32.mrf.mxu0
    %v810 = vadd.f32 %v735, %v809
    %v811 = vpop.f32.mrf.mxu0
    %812 = vmatprep.mubr.f32.mxu0 0.0
    %813 = vmatmul.mubr.f32.gmra.mxu0 %v741
    %v814 = vpop.f32.mrf.mxu0
    %v815 = vadd.f32 %v735, %v814
    %v816 = vpop.f32.mrf.mxu0
    %817 = vdwg.mxu0
    %v818 = vadd.f32 %v112, %v810
    %v819 = vadd.f32 %v113, %v815
    %v820 = vld [vmem:[%s8] sm:$0x1]
    %v821 = vld [vmem:[%s9] sm:$0x1]
    %v822 = vsel %vm125, %v818, 0.0
    %823 = vadd.xlane.f32.xlu0 %v822
    %v824 = vpop.xlane.xlu0 %823
    %v825 = vsel %vm125, %v819, 0.0
    %826 = vadd.xlane.f32.xlu0 %v825
    %v827 = vpop.xlane.xlu0 %826
    %v828 = vrcp.pop 32.0
    %v829 = vmul.f32 %v824, %v828
    %v830 = vmul.f32 %v827, %v828
    %v831 = vsub.f32 %v818, %v829
    %v832 = vsub.f32 %v819, %v830
    %v833 = vmul.f32 %v831, %v831
    %v834 = vmul.f32 %v832, %v832
    %v835 = vsel %vm125, %v833, 0.0
    %836 = vadd.xlane.f32.xlu0 %v835
    %v837 = vpop.xlane.xlu0 %836
    %v838 = vsel %vm125, %v834, 0.0
    %839 = vadd.xlane.f32.xlu0 %v838
    %v840 = vpop.xlane.xlu0 %839
    %v841 = vmul.f32 %v837, %v828
    %v842 = vmul.f32 %v840, %v828
    %v843 = vadd.f32 %v841, 1e-12
    %v844 = vadd.f32 %v842, 1e-12
    %v845 = vrsqrt.pop %v843
    %v846 = vrsqrt.pop %v844
    %v847 = vmul.f32 %v831, %v845
    %v848 = vmul.f32 %v832, %v846
    %v850 = vlaneseq
    %v851 = vshrl.u32 %v850, 7
    %v852 = vsub.s32 0, %v851
    %v853 = vrot.slane %v820, %v852
    %v855 = vmul.f32 %v847, %v853
    %v856 = vmul.f32 %v848, %v853
    %v858 = vlaneseq
    %v859 = vshrl.u32 %v858, 7
    %v860 = vsub.s32 0, %v859
    %v861 = vrot.slane %v821, %v860
    %v863 = vadd.f32 %v855, %v861
    %v864 = vadd.f32 %v856, %v861
    %v865 = vld [vmem:[#allocation8] sm:$0xff]
    %v866 = vld [vmem:[#allocation8 + $0x8] sm:$0xff]
    %v867 = vld [vmem:[#allocation8 + $0x10] sm:$0xff]
    %v868 = vld [vmem:[#allocation8 + $0x18] sm:$0xff]
    %v869 = vld [vmem:[%s11] sm:$0x1]
    %v871 = vlaneseq
    %v872 = vshrl.u32 %v871, 7
    %v873 = vsub.s32 0, %v872
    %v874 = vrot.slane %v869, %v873
    %v877 = vsel %vm125, %v863, 0
    %v880 = vsel %vm125, %v864, 0
    %882 = vmatprep.subr.mxu0 0.0
    %883 = vmatpush1.msra.mxu0 0.0
    %884 = vmatprep.subr.mxu0 0.0
    %885 = vmatpush1.msra.mxu0 0.0
    %886 = vmatprep.subr.mxu0 0.0
    %887 = vmatpush1.msra.mxu0 0.0
    %888 = vmatprep.subr.mxu0 0.0
    %889 = vmatpush1.msra.mxu0 0.0
    %890 = vmatprep.subr.mxu0 0.0
    %891 = vmatpush1.msra.mxu0 0.0
    %892 = vmatprep.subr.mxu0 0.0
    %893 = vmatpush1.msra.mxu0 0.0
    %894 = vmatprep.subr.mxu0 0.0
    %895 = vmatpush1.msra.mxu0 0.0
    %896 = vmatprep.subr.mxu0 0.0
    %897 = vmatpush1.msra.mxu0 0.0
    %898 = vmatprep.subr.mxu0 0.0
    %899 = vmatpush1.msra.mxu0 0.0
    %900 = vmatprep.subr.mxu0 0.0
    %901 = vmatpush1.msra.mxu0 0.0
    %902 = vmatprep.subr.mxu0 0.0
    %903 = vmatpush1.msra.mxu0 0.0
    %904 = vmatprep.subr.mxu0 0.0
    %905 = vmatpush1.msra.mxu0 0.0
    %906 = vmatprep.subr.mxu0 0.0
    %907 = vmatpush1.msra.mxu0 %v868
    %908 = vmatprep.subr.mxu0 0.0
    %909 = vmatpush1.msra.mxu0 %v867
    %910 = vmatprep.subr.mxu0 0.0
    %911 = vmatpush1.msra.mxu0 %v866
    %912 = vmatprep.subr.mxu0 0.0
    %913 = vmatpush1.msra.mxu0 %v865
    %914 = vmatprep.subr.mxu0 0.0
    %915 = vmatpush2.msra.mxu0 0.0
    %916 = vmatprep.subr.mxu0 0.0
    %917 = vmatpush2.msra.mxu0 0.0
    %918 = vmatprep.subr.mxu0 0.0
    %919 = vmatpush2.msra.mxu0 0.0
    %920 = vmatprep.subr.mxu0 0.0
    %921 = vmatpush2.msra.mxu0 0.0
    %922 = vmatprep.subr.mxu0 0.0
    %923 = vmatpush2.msra.mxu0 0.0
    %924 = vmatprep.subr.mxu0 0.0
    %925 = vmatpush2.msra.mxu0 0.0
    %926 = vmatprep.subr.mxu0 0.0
    %927 = vmatpush2.msra.mxu0 0.0
    %928 = vmatprep.subr.mxu0 0.0
    %929 = vmatpush2.msra.mxu0 0.0
    %930 = vmatprep.subr.mxu0 0.0
    %931 = vmatpush2.msra.mxu0 0.0
    %932 = vmatprep.subr.mxu0 0.0
    %933 = vmatpush2.msra.mxu0 0.0
    %934 = vmatprep.subr.mxu0 0.0
    %935 = vmatpush2.msra.mxu0 0.0
    %936 = vmatprep.subr.mxu0 0.0
    %937 = vmatpush2.msra.mxu0 0.0
    %938 = vmatprep.subr.mxu0 0.0
    %939 = vmatpush2.msra.mxu0 0.0
    %940 = vmatprep.subr.mxu0 0.0
    %941 = vmatpush2.msra.mxu0 0.0
    %942 = vmatprep.subr.mxu0 0.0
    %943 = vmatpush2.msra.mxu0 0.0
    %944 = vmatprep.subr.mxu0 0.0
    %945 = vmatpush2.msra.mxu0 0.0
    %946 = vmatprep.mubr.f32.mxu0 0.0
    %947 = vmatmul.mubr.f32.gmra.mxu0 %v877
    %v948 = vpop.f32.mrf.mxu0
    %v949 = vadd.f32 %v874, %v948
    %v950 = vpop.f32.mrf.mxu0
    %951 = vmatprep.mubr.f32.mxu0 0.0
    %952 = vmatmul.mubr.f32.gmra.mxu0 %v880
    %v953 = vpop.f32.mrf.mxu0
    %v954 = vadd.f32 %v874, %v953
    %v955 = vpop.f32.mrf.mxu0
    %956 = vdwg.mxu0
    %v957 = vmul.f32 %v949, %v949
    %v958 = vmul.f32 %v954, %v954
    %v959 = vmul.f32 %v949, %v957
    %v960 = vmul.f32 %v954, %v958
    %v961 = vmul.f32 %v959, 0.044715
    %v962 = vmul.f32 %v960, 0.044715
    %v963 = vadd.f32 %v949, %v961
    %v964 = vadd.f32 %v954, %v962
    %v965 = vmul.f32 %v963, 0.7978846
    %v966 = vmul.f32 %v964, 0.7978846
    %v967 = vtanh.pop %v965
    %v968 = vtanh.pop %v966
    %v969 = vadd.f32 %v967, 1.0
    %v970 = vadd.f32 %v968, 1.0
    %v971 = vmul.f32 %v969, 0.5
    %v972 = vmul.f32 %v970, 0.5
    %v973 = vmul.f32 %v949, %v971
    %v974 = vmul.f32 %v954, %v972
    %v975 = vld [vmem:[%s12] sm:$0xff]
    %v976 = vld [vmem:[%s12 + $0x8] sm:$0xff]
    %v977 = vld [vmem:[%s12 + $0x10] sm:$0xff]
    %v978 = vld [vmem:[%s12 + $0x18] sm:$0xff]
    %v979 = vld [vmem:[%s12 + $0x20] sm:$0xff]
    %v980 = vld [vmem:[%s12 + $0x28] sm:$0xff]
    %v981 = vld [vmem:[%s12 + $0x30] sm:$0xff]
    %v982 = vld [vmem:[%s12 + $0x38] sm:$0xff]
    %v983 = vld [vmem:[%s13] sm:$0x1]
    %v985 = vlaneseq
    %v986 = vshrl.u32 %v985, 7
    %v987 = vsub.s32 0, %v986
    %v988 = vrot.slane %v983, %v987
    %vm990 = vcmask 523264
    %v992 = vsel %vm990, %v973, 0
    %v995 = vsel %vm990, %v974, 0
    %997 = vmatprep.subr.mxu0 0.0
    %998 = vmatpush1.msra.mxu0 0.0
    %999 = vmatprep.subr.mxu0 0.0
    %1000 = vmatpush1.msra.mxu0 0.0
    %1001 = vmatprep.subr.mxu0 0.0
    %1002 = vmatpush1.msra.mxu0 0.0
    %1003 = vmatprep.subr.mxu0 0.0
    %1004 = vmatpush1.msra.mxu0 0.0
    %1005 = vmatprep.subr.mxu0 0.0
    %1006 = vmatpush1.msra.mxu0 0.0
    %1007 = vmatprep.subr.mxu0 0.0
    %1008 = vmatpush1.msra.mxu0 0.0
    %1009 = vmatprep.subr.mxu0 0.0
    %1010 = vmatpush1.msra.mxu0 0.0
    %1011 = vmatprep.subr.mxu0 0.0
    %1012 = vmatpush1.msra.mxu0 0.0
    %1013 = vmatprep.subr.mxu0 0.0
    %1014 = vmatpush1.msra.mxu0 %v982
    %1015 = vmatprep.subr.mxu0 0.0
    %1016 = vmatpush1.msra.mxu0 %v981
    %1017 = vmatprep.subr.mxu0 0.0
    %1018 = vmatpush1.msra.mxu0 %v980
    %1019 = vmatprep.subr.mxu0 0.0
    %1020 = vmatpush1.msra.mxu0 %v979
    %1021 = vmatprep.subr.mxu0 0.0
    %1022 = vmatpush1.msra.mxu0 %v978
    %1023 = vmatprep.subr.mxu0 0.0
    %1024 = vmatpush1.msra.mxu0 %v977
    %1025 = vmatprep.subr.mxu0 0.0
    %1026 = vmatpush1.msra.mxu0 %v976
    %1027 = vmatprep.subr.mxu0 0.0
    %1028 = vmatpush1.msra.mxu0 %v975
    %1029 = vmatprep.subr.mxu0 0.0
    %1030 = vmatpush2.msra.mxu0 0.0
    %1031 = vmatprep.subr.mxu0 0.0
    %1032 = vmatpush2.msra.mxu0 0.0
    %1033 = vmatprep.subr.mxu0 0.0
    %1034 = vmatpush2.msra.mxu0 0.0
    %1035 = vmatprep.subr.mxu0 0.0
    %1036 = vmatpush2.msra.mxu0 0.0
    %1037 = vmatprep.subr.mxu0 0.0
    %1038 = vmatpush2.msra.mxu0 0.0
    %1039 = vmatprep.subr.mxu0 0.0
    %1040 = vmatpush2.msra.mxu0 0.0
    %1041 = vmatprep.subr.mxu0 0.0
    %1042 = vmatpush2.msra.mxu0 0.0
    %1043 = vmatprep.subr.mxu0 0.0
    %1044 = vmatpush2.msra.mxu0 0.0
    %1045 = vmatprep.subr.mxu0 0.0
    %1046 = vmatpush2.msra.mxu0 0.0
    %1047 = vmatprep.subr.mxu0 0.0
    %1048 = vmatpush2.msra.mxu0 0.0
    %1049 = vmatprep.subr.mxu0 0.0
    %1050 = vmatpush2.msra.mxu0 0.0
    %1051 = vmatprep.subr.mxu0 0.0
    %1052 = vmatpush2.msra.mxu0 0.0
    %1053 = vmatprep.subr.mxu0 0.0
    %1054 = vmatpush2.msra.mxu0 0.0
    %1055 = vmatprep.subr.mxu0 0.0
    %1056 = vmatpush2.msra.mxu0 0.0
    %1057 = vmatprep.subr.mxu0 0.0
    %1058 = vmatpush2.msra.mxu0 0.0
    %1059 = vmatprep.subr.mxu0 0.0
    %1060 = vmatpush2.msra.mxu0 0.0
    %1061 = vmatprep.mubr.f32.mxu0 0.0
    %1062 = vmatmul.mubr.f32.gmra.mxu0 %v992
    %v1063 = vpop.f32.mrf.mxu0
    %v1064 = vadd.f32 %v988, %v1063
    %v1065 = vpop.f32.mrf.mxu0
    %1066 = vmatprep.mubr.f32.mxu0 0.0
    %1067 = vmatmul.mubr.f32.gmra.mxu0 %v995
    %v1068 = vpop.f32.mrf.mxu0
    %v1069 = vadd.f32 %v988, %v1068
    %v1070 = vpop.f32.mrf.mxu0
    %1071 = vdwg.mxu0
    %v1072 = vadd.f32 %v1064, %v863
    %v1073 = vadd.f32 %v1069, %v864
    %v1074 = vld [vmem:[%s14] sm:$0x1]
    %v1075 = vld [vmem:[%s15] sm:$0x1]
    %v1076 = vsel %vm125, %v1072, 0.0
    %1077 = vadd.xlane.f32.xlu0 %v1076
    %v1078 = vpop.xlane.xlu0 %1077
    %v1079 = vsel %vm125, %v1073, 0.0
    %1080 = vadd.xlane.f32.xlu0 %v1079
    %v1081 = vpop.xlane.xlu0 %1080
    %v1082 = vmul.f32 %v1078, %v828
    %v1083 = vmul.f32 %v1081, %v828
    %v1084 = vsub.f32 %v1072, %v1082
    %v1085 = vsub.f32 %v1073, %v1083
    %v1086 = vmul.f32 %v1084, %v1084
    %v1087 = vmul.f32 %v1085, %v1085
    %v1088 = vsel %vm125, %v1086, 0.0
    %1089 = vadd.xlane.f32.xlu0 %v1088
    %v1090 = vpop.xlane.xlu0 %1089
    %v1091 = vsel %vm125, %v1087, 0.0
    %1092 = vadd.xlane.f32.xlu0 %v1091
    %v1093 = vpop.xlane.xlu0 %1092
    %v1094 = vmul.f32 %v1090, %v828
    %v1095 = vmul.f32 %v1093, %v828
    %v1096 = vadd.f32 %v1094, 1e-12
    %v1097 = vadd.f32 %v1095, 1e-12
    %v1098 = vrsqrt.pop %v1096
    %v1099 = vrsqrt.pop %v1097
    %v1100 = vmul.f32 %v1084, %v1098
    %v1101 = vmul.f32 %v1085, %v1099
    %v1103 = vlaneseq
    %v1104 = vshrl.u32 %v1103, 7
    %v1105 = vsub.s32 0, %v1104
    %v1106 = vrot.slane %v1074, %v1105
    %v1108 = vmul.f32 %v1100, %v1106
    %v1109 = vmul.f32 %v1101, %v1106
    %v1111 = vlaneseq
    %v1112 = vshrl.u32 %v1111, 7
    %v1113 = vsub.s32 0, %v1112
    %v1114 = vrot.slane %v1075, %v1113
    %v1116 = vadd.f32 %v1108, %v1114
    %v1117 = vadd.f32 %v1109, %v1114
    %1118 = vst.msk [vmem:[#allocation10] sm:$0xff] %vm125, %v1116
    %1119 = vst.msk [vmem:[#allocation10 + $0x8] sm:$0xff] %vm125, %v1117
    // Predicated region
    $region82: #{tpu_custom_call.1} parent=1 // pred_check
      _
    $region83: #{tpu_custom_call.1} parent=1 // pred_check_branch
      %1121 = sbr.rel (0) target = $region85
    $region84: #{tpu_custom_call.1} parent=1 // pred_region
      %s1123 = ssub.s32 256, 256
      %1124 = vsyncadd [#allocation4], %s1123
      %s1125 = sshll.u32 [#allocation10], 4
      %s1126 = int_to_ptr.vmem [resolvable:$true] %s1125
      %1131 = dma.vmem_to_hbm [thread:$0]  %s1126, 256, %s16, [#allocation4], 128, 128, 8
    $region85: #{tpu_custom_call.1} parent=1 // pred_fallthru
      _
    // Predicated region
    $region86: #{tpu_custom_call.1} parent=1 // pred_check
      _
    $region87: #{tpu_custom_call.1} parent=1 // pred_check_branch
      %1133 = sbr.rel (0) target = $region89
    $region88: #{tpu_custom_call.1} parent=1 // pred_region
      %s1135 = ssub.s32 256, 256
      %1136 = vsyncadd [#allocation12], %s1135
      %s1137 = sshll.u32 [#allocation11], 4
      %s1138 = int_to_ptr.vmem [resolvable:$true] %s1137
      %1143 = dma.vmem_to_hbm [thread:$0]  %s1138, 256, %s17, [#allocation12], 128, 128, 8
    $region89: #{tpu_custom_call.1} parent=1 // pred_fallthru
      _
    // Predicated region
    $region90: #{tpu_custom_call.1} parent=1 // pred_check
      _
    $region91: #{tpu_custom_call.1} parent=1 // pred_check_branch
      %1145 = sbr.rel (0) target = $region93
    $region92: #{tpu_custom_call.1} parent=1 // pred_region
      %1146 = dma.done [#allocation4], 256
    $region93: #{tpu_custom_call.1} parent=1 // pred_fallthru
      _
    // Predicated region
    $region94: #{tpu_custom_call.1} parent=1 // pred_check
      _
    $region95: #{tpu_custom_call.1} parent=1 // pred_check_branch
      %1148 = sbr.rel (0) target = $region97
    $region96: #{tpu_custom_call.1} parent=1 // pred_region
      %1149 = dma.done [#allocation12], 256
    $region97: #{tpu_custom_call.1} parent=1 // pred_fallthru
      _
    %1150 = vsyncpa [#allocation3], 1
    %1151 = vsyncpa [#allocation6], 1
    %1152 = vsyncpa [#allocation9], 1
    %1153 = vsyncpa [#allocation4], 1
    %1154 = vsyncpa [#allocation12], 1

</llo_original>
